<compile_context>
chip_gen: v7x
topology: tpu7x:2x2x1
jax: 0.10.0
libtpu: 0.0.40
codegen_flags: <defaults>
</compile_context>

<pallas_src>
import functools

import jax
import jax.numpy as jnp
from jax.experimental import pallas as pl
from jax.experimental.pallas import tpu as pltpu

_LANE = 128
# Below this C_in the contraction is fully unrolled on the VPU (broadcast FMAs).
_VPU_CIN_THRESHOLD = 16


def _outconv_kernel(x_ref, w_ref, b_ref, o_ref):
    # x_ref: (1, C_in, t_hw)   VMEM  (lane-dense spatial tile)
    # w_ref: (C_out, C_in)     VMEM  (full weight, resident)
    # b_ref: (C_out, 1)        VMEM
    # o_ref: (1, C_out, t_hw)  VMEM  (lane-dense output tile, NCHW-native)
    x = x_ref[0]                       # (C_in, t_hw)
    w = w_ref[...]                     # (C_out, C_in)
    b = b_ref[...].astype(jnp.float32)  # (C_out, 1)
    c_out, c_in = w.shape

    xf = x.astype(jnp.float32)
    wf = w.astype(jnp.float32)

    if c_in <= _VPU_CIN_THRESHOLD:
        # Tiny channel count: unrolled VPU broadcast-FMA, no MXU involved.
        acc = wf[:, 0:1] * xf[0:1, :]                  # (C_out, t_hw)
        for ci in range(1, c_in):
            acc = acc + wf[:, ci:ci + 1] * xf[ci:ci + 1, :]
    else:
        # Larger channel counts: real MXU matmul, f32 accumulation.
        acc = jnp.dot(wf, xf, preferred_element_type=jnp.float32)

    o_ref[0] = (acc + b).astype(o_ref.dtype)


@functools.partial(jax.jit, static_argnames=("t_hw",))
def out_conv(x_nchw, weight, bias, *, t_hw=None):
    """1x1 Conv2d forward (PyTorch OutConv semantics).

    Args:
      x_nchw: (N, C_in, H, W)
      weight: (C_out, C_in, 1, 1)  (PyTorch Conv2d weight shape)
      bias:   (C_out,)
    Returns:
      (N, C_out, H, W), same dtype as x_nchw.
    """
    N, C_in, H, W = x_nchw.shape
    C_out = weight.shape[0]
    HW = H * W

    # Free reshapes: NCHW is contiguous, no transposes / extra HBM traffic.
    x3 = x_nchw.reshape(N, C_in, HW)
    w2 = weight.reshape(C_out, C_in)
    b2 = bias.reshape(C_out, 1)

    # ---- Tile selection: lane-dense and as large as comfortably fits VMEM ----
    hw_min = pl.cdiv(HW, _LANE) * _LANE          # HW rounded up to a lane multiple
    if t_hw is None:
        # ~8 MiB budget for the double-buffered x + y tiles -> safe on every
        # generation, including v7x's smaller (64 MiB physical / 32 MiB scoped)
        # VMEM, while big enough to sit near the HBM roofline.
        budget_bytes = 8 * 1024 * 1024
        bytes_per_lane_col = 2 * 4 * (C_in + C_out)   # dbl-buffered in+out, f32
        cap = max(_LANE, (budget_bytes // bytes_per_lane_col) // _LANE * _LANE)
        t_hw = int(min(2048, cap, hw_min))
    t_hw = max(_LANE, (int(t_hw) // _LANE) * _LANE)

    # Pad the spatial axis so every tile is full (slice the pad off afterwards).
    HW_p = pl.cdiv(HW, t_hw) * t_hw
    if HW_p != HW:
        x3 = jnp.pad(x3, ((0, 0), (0, 0), (0, HW_p - HW)))

    grid = (N, HW_p // t_hw)

    cost = pl.CostEstimate(
        flops=2 * N * HW_p * C_in * C_out,
        transcendentals=0,
        bytes_accessed=4 * (N * HW_p * (C_in + C_out) + C_in * C_out + C_out),
    )

    y3 = pl.pallas_call(
        _outconv_kernel,
        out_shape=jax.ShapeDtypeStruct((N, C_out, HW_p), x_nchw.dtype),
        grid_spec=pltpu.PrefetchScalarGridSpec(
            num_scalar_prefetch=0,
            grid=grid,
            in_specs=[
                # Input tile: (C_in, t_hw) is lane-dense (t_hw % 128 == 0).
                pl.BlockSpec((1, C_in, t_hw), lambda n, j: (n, 0, j)),
                # Full (tiny) weight and bias, constant block index -> resident.
                pl.BlockSpec((C_out, C_in), lambda n, j: (0, 0)),
                pl.BlockSpec((C_out, 1), lambda n, j: (0, 0)),
            ],
            out_specs=pl.BlockSpec((1, C_out, t_hw), lambda n, j: (n, 0, j)),
        ),
        compiler_params=pltpu.CompilerParams(
            # Both grid axes are independent -> shard across v7x's 2 TensorCores.
            dimension_semantics=("parallel", "parallel"),
            vmem_limit_bytes=32 * 1024 * 1024,
        ),
        cost_estimate=cost,
    )(x3, w2, b2)

    if HW_p != HW:
        y3 = y3[:, :, :HW]
    return y3.reshape(N, C_out, H, W)


def _reference(x, weight, bias):
    C_out, C_in = weight.shape[0], weight.shape[1]
    return (jnp.einsum("nchw,oc->nohw", x, weight.reshape(C_out, C_in))
            + bias.reshape(1, C_out, 1, 1))


if __name__ == "__main__":
    key = jax.random.PRNGKey(0)
    k_x, k_w, k_b, k_x2, k_w2, k_b2 = jax.random.split(key, 6)

    # Primary check: shapes implied by the module (batch=2, 4 -> 3 channels, 16x16).
    N, C_in, H, W = 2, 4, 16, 16
    C_out = 3
    x = jax.random.normal(k_x, (N, C_in, H, W), dtype=jnp.float32)
    weight = jax.random.normal(k_w, (C_out, C_in, 1, 1), dtype=jnp.float32) * 0.1
    bias = jax.random.normal(k_b, (C_out,), dtype=jnp.float32) * 0.1

    y = out_conv(x, weight, bias)
    jax.block_until_ready(y)
    y_ref = _reference(x, weight, bias)
    assert y.shape == (N, C_out, H, W)
    assert jnp.allclose(y, y_ref, atol=1e-5, rtol=1e-5)

    # Secondary check: spatial size not a multiple of the lane width (padding path).
    N2, C_in2, H2, W2, C_out2 = 2, 5, 10, 10, 2
    x2 = jax.random.normal(k_x2, (N2, C_in2, H2, W2), dtype=jnp.float32)
    w2 = jax.random.normal(k_w2, (C_out2, C_in2, 1, 1), dtype=jnp.float32) * 0.1
    b2 = jax.random.normal(k_b2, (C_out2,), dtype=jnp.float32) * 0.1
    y2 = out_conv(x2, w2, b2)
    jax.block_until_ready(y2)
    assert y2.shape == (N2, C_out2, H2, W2)
    assert jnp.allclose(y2, _reference(x2, w2, b2), atol=1e-5, rtol=1e-5)

    print("KERNEL_OK")
</pallas_src>

<mosaic_0001>
module attributes {stable_mosaic.version = 11 : i64} {
  func.func @_outconv_kernel(%arg0: i32, %arg1: i32, %arg2: memref<1x4x256xf32, #tpu.memory_space<vmem>>, %arg3: memref<3x4xf32, #tpu.memory_space<vmem>>, %arg4: memref<3x1xf32, #tpu.memory_space<vmem>>, %arg5: memref<1x3x256xf32, #tpu.memory_space<vmem>>) attributes {dimension_semantics = [#tpu.dimension_semantics<parallel>, #tpu.dimension_semantics<parallel>], iteration_bounds = array<i64: 2, 1>, scalar_prefetch = 0 : i64, scratch_operands = 0 : i64, tpu.core_type = #tpu.core_type<tc>, window_params = [{transform_indices = @transform_0, window_bounds = array<i64: 1, 4, 256>}, {pipeline_mode = #tpu.pipeline_mode<synchronous>, transform_indices = @transform_1, window_bounds = array<i64: 3, 4>}, {pipeline_mode = #tpu.pipeline_mode<synchronous>, transform_indices = @transform_2, window_bounds = array<i64: 3, 1>}, {transform_indices = @transform_3, window_bounds = array<i64: 1, 3, 256>}]} {
    %c0 = arith.constant 0 : index
    %c0_0 = arith.constant 0 : index
    %c0_1 = arith.constant 0 : index
    %0 = vector.load %arg2[%c0, %c0_0, %c0_1] : memref<1x4x256xf32, #tpu.memory_space<vmem>>, vector<1x4x256xf32>
    %1 = vector.shape_cast %0 : vector<1x4x256xf32> to vector<4x256xf32>
    %c0_2 = arith.constant 0 : index
    %c0_3 = arith.constant 0 : index
    %2 = vector.load %arg3[%c0_2, %c0_3] : memref<3x4xf32, #tpu.memory_space<vmem>>, vector<3x4xf32>
    %c0_4 = arith.constant 0 : index
    %c0_5 = arith.constant 0 : index
    %3 = vector.load %arg4[%c0_4, %c0_5] : memref<3x1xf32, #tpu.memory_space<vmem>>, vector<3x1xf32>
    %4 = vector.extract_strided_slice %2 {offsets = [0, 0], sizes = [3, 1], strides = [1, 1]} : vector<3x4xf32> to vector<3x1xf32>
    %5 = vector.extract_strided_slice %1 {offsets = [0, 0], sizes = [1, 256], strides = [1, 1]} : vector<4x256xf32> to vector<1x256xf32>
    %6 = vector.broadcast %4 : vector<3x1xf32> to vector<3x256xf32>
    %7 = vector.broadcast %5 : vector<1x256xf32> to vector<3x256xf32>
    %8 = arith.mulf %6, %7 : vector<3x256xf32>
    %9 = vector.extract_strided_slice %2 {offsets = [0, 1], sizes = [3, 1], strides = [1, 1]} : vector<3x4xf32> to vector<3x1xf32>
    %10 = vector.extract_strided_slice %1 {offsets = [1, 0], sizes = [1, 256], strides = [1, 1]} : vector<4x256xf32> to vector<1x256xf32>
    %11 = vector.broadcast %9 : vector<3x1xf32> to vector<3x256xf32>
    %12 = vector.broadcast %10 : vector<1x256xf32> to vector<3x256xf32>
    %13 = arith.mulf %11, %12 : vector<3x256xf32>
    %14 = arith.addf %8, %13 : vector<3x256xf32>
    %15 = vector.extract_strided_slice %2 {offsets = [0, 2], sizes = [3, 1], strides = [1, 1]} : vector<3x4xf32> to vector<3x1xf32>
    %16 = vector.extract_strided_slice %1 {offsets = [2, 0], sizes = [1, 256], strides = [1, 1]} : vector<4x256xf32> to vector<1x256xf32>
    %17 = vector.broadcast %15 : vector<3x1xf32> to vector<3x256xf32>
    %18 = vector.broadcast %16 : vector<1x256xf32> to vector<3x256xf32>
    %19 = arith.mulf %17, %18 : vector<3x256xf32>
    %20 = arith.addf %14, %19 : vector<3x256xf32>
    %21 = vector.extract_strided_slice %2 {offsets = [0, 3], sizes = [3, 1], strides = [1, 1]} : vector<3x4xf32> to vector<3x1xf32>
    %22 = vector.extract_strided_slice %1 {offsets = [3, 0], sizes = [1, 256], strides = [1, 1]} : vector<4x256xf32> to vector<1x256xf32>
    %23 = vector.broadcast %21 : vector<3x1xf32> to vector<3x256xf32>
    %24 = vector.broadcast %22 : vector<1x256xf32> to vector<3x256xf32>
    %25 = arith.mulf %23, %24 : vector<3x256xf32>
    %26 = arith.addf %20, %25 : vector<3x256xf32>
    %27 = vector.broadcast %3 : vector<3x1xf32> to vector<3x256xf32>
    %28 = arith.addf %26, %27 : vector<3x256xf32>
    %c0_6 = arith.constant 0 : index
    %c0_7 = arith.constant 0 : index
    %c0_8 = arith.constant 0 : index
    %29 = vector.load %arg5[%c0_6, %c0_7, %c0_8] : memref<1x3x256xf32, #tpu.memory_space<vmem>>, vector<1x3x256xf32>
    %30 = vector.shape_cast %29 : vector<1x3x256xf32> to vector<3x256xf32>
    %31 = vector.shape_cast %28 : vector<3x256xf32> to vector<1x3x256xf32>
    tpu.vector_store %arg5[%c0_6, %c0_7, %c0_8], %31 {strides = array<i32>} : memref<1x3x256xf32, #tpu.memory_space<vmem>>, vector<1x3x256xf32>,
    return
  }
  func.func @transform_0(%arg0: i32, %arg1: i32) -> (i32, i32, i32) {
    %c0_i32 = arith.constant 0 : i32
    %c0_i32_0 = arith.constant 0 : i32
    return %arg0, %c0_i32, %arg1 : i32, i32, i32
  }
  func.func @transform_1(%arg0: i32, %arg1: i32) -> (i32, i32) {
    %c0_i32 = arith.constant 0 : i32
    %c0_i32_0 = arith.constant 0 : i32
    %c0_i32_1 = arith.constant 0 : i32
    return %c0_i32, %c0_i32_0 : i32, i32
  }
  func.func @transform_2(%arg0: i32, %arg1: i32) -> (i32, i32) {
    %c0_i32 = arith.constant 0 : i32
    %c0_i32_0 = arith.constant 0 : i32
    %c0_i32_1 = arith.constant 0 : i32
    return %c0_i32, %c0_i32_0 : i32, i32
  }
  func.func @transform_3(%arg0: i32, %arg1: i32) -> (i32, i32, i32) {
    %c0_i32 = arith.constant 0 : i32
    %c0_i32_0 = arith.constant 0 : i32
    return %arg0, %c0_i32, %arg1 : i32, i32, i32
  }
}

</mosaic_0001>

<llo_original>
// kernel: out_conv.1
$region0: #{out_conv.1}
  #allocation0 [shape = 'u32[]', space=smem, size = 0x4, offset = 0x4, fixed_abs, tag = 'smem constant byte address 0x4 - core index']
  #allocation1 [shape = 'u32[144,128]{1,0:T(1,128)}', space=vmem, size = 0x12000, scoped, tag = 'internal scratch']
  %s0 = inlined_call_operand.vmem [shape: f32[2,4,256], index: 0, kind: input, shape index: {}]
  %s1 = inlined_call_operand.vmem [shape: f32[3,4], index: 1, kind: input, shape index: {}]
  %s2 = inlined_call_operand.vmem [shape: f32[3,1], index: 2, kind: input, shape index: {}]
  %s3 = inlined_call_operand.vmem [shape: f32[2,3,256], index: 3, kind: output, shape index: {}]
  %s4 = sld [smem:[#allocation0]]
  $region45: #{out_conv.1} parent=0
    _
  %s6 = ssub.s32 1, %s4
  %s7 = scalar_select 0, %s6, %s4
  loop: start=0, step=1, limit=4
  $region2: #{out_conv.1} parent=0 // loop_pre_header
    _
  $region3: #{out_conv.1} parent=0 // loop_header
    %s9 = sphi 0, %s13
    %p10 = scmp.ge.s32.totalorder %s9, 4
    %s16 = sphi 0, %s28
    %s17 = sphi 0, %s24
    %s18 = sphi 0, %s16
    %s19 = sphi 0, %s17
    %s20 = sphi 0, %s18
    %s21 = sphi 0, %s19
    %s33 = sphi 0, %s35
    %s36 = sphi 0, %s33
    %s37 = sphi 0, %s36
    %s53 = sphi 0, %s37
    %s57 = sphi 0, %s57
    %s59 = sphi 0, %s57
    %s60 = sphi 0, %s59
    %s74 = sphi 0, %s60
    %s78 = sphi 0, %s78
    %s80 = sphi 0, %s78
    %s81 = sphi 0, %s80
    %s95 = sphi 0, %s81
    %s103 = sphi 0, %s105
    %s106 = sphi 0, %s103
    %s107 = sphi 0, %s106
    %s123 = sphi 0, %s107
  $region4: #{out_conv.1} parent=0 // loop_header_branch
    %12 = sbr.rel (%p10) target = $region8
  $region5: #{out_conv.1} parent=0 // loop_body
    %s14 = ssub.s32 %s9, 1
    %s15 = ssub.s32 %s9, 2
    %s22 = sadd.s32 1, %s17
    %p23 = scmp.ge.s32.totalorder %s22, 1
    %s24 = scalar_select %p23, 0, %s22
    %s25 = sadd.s32 1, %s16
    %s26 = scalar_select %p23, %s25, %s16
    %p27 = scmp.ge.s32.totalorder %s26, 2
    %s28 = scalar_select %p27, 0, %s26
    %s29 = ssub.s32 %s16, %s28
    %s30 = ssub.s32 %s17, %s24
    %s31 = sor.u32 %s29, %s30
    %p32 = scmp.eq.s32.totalorder %s31, 0
    %s34 = sadd.s32 %s33, 1
    %s35 = scalar_select %p32, %s33, %s34
    %p38 = pneg %p32
    %p39 = scmp.eq.s32.totalorder %s9, 1
    %p40 = por %p38, %p39
    %p41 = scmp.ne.s32.totalorder %s33, %s36
    %p42 = scmp.eq.s32.totalorder %s9, 0
    %p43 = por %p41, %p42
    %p44 = scmp.ne.s32.totalorder %s33, %s36
    %p45 = scmp.eq.s32.totalorder %s14, 1
    %p46 = por %p44, %p45
    %p47 = scmp.ne.s32.totalorder %s36, %s37
    %p48 = scmp.eq.s32.totalorder %s14, 0
    %p49 = por %p47, %p48
    %p50 = scmp.ne.s32.totalorder %s36, %s37
    %p51 = scmp.eq.s32.totalorder %s15, 1
    %p52 = por %p50, %p51
    %p54 = scmp.ne.s32.totalorder %s37, %s53
    %p55 = scmp.eq.s32.totalorder %s15, 0
    %p56 = por %p54, %p55
    %s58 = sadd.s32 %s57, 1
    %p61 = scmp.eq.s32.totalorder %s9, 1
    %p62 = scmp.ne.s32.totalorder %s57, %s59
    %p63 = scmp.eq.s32.totalorder %s9, 0
    %p64 = por %p62, %p63
    %p65 = scmp.ne.s32.totalorder %s57, %s59
    %p66 = scmp.eq.s32.totalorder %s14, 1
    %p67 = por %p65, %p66
    %p68 = scmp.ne.s32.totalorder %s59, %s60
    %p69 = scmp.eq.s32.totalorder %s14, 0
    %p70 = por %p68, %p69
    %p71 = scmp.ne.s32.totalorder %s59, %s60
    %p72 = scmp.eq.s32.totalorder %s15, 1
    %p73 = por %p71, %p72
    %p75 = scmp.ne.s32.totalorder %s60, %s74
    %p76 = scmp.eq.s32.totalorder %s15, 0
    %p77 = por %p75, %p76
    %s79 = sadd.s32 %s78, 1
    %p82 = scmp.eq.s32.totalorder %s9, 1
    %p83 = scmp.ne.s32.totalorder %s78, %s80
    %p84 = scmp.eq.s32.totalorder %s9, 0
    %p85 = por %p83, %p84
    %p86 = scmp.ne.s32.totalorder %s78, %s80
    %p87 = scmp.eq.s32.totalorder %s14, 1
    %p88 = por %p86, %p87
    %p89 = scmp.ne.s32.totalorder %s80, %s81
    %p90 = scmp.eq.s32.totalorder %s14, 0
    %p91 = por %p89, %p90
    %p92 = scmp.ne.s32.totalorder %s80, %s81
    %p93 = scmp.eq.s32.totalorder %s15, 1
    %p94 = por %p92, %p93
    %p96 = scmp.ne.s32.totalorder %s81, %s95
    %p97 = scmp.eq.s32.totalorder %s15, 0
    %p98 = por %p96, %p97
    %s99 = ssub.s32 %s16, %s28
    %s100 = ssub.s32 %s17, %s24
    %s101 = sor.u32 %s99, %s100
    %p102 = scmp.eq.s32.totalorder %s101, 0
    %s104 = sadd.s32 %s103, 1
    %s105 = scalar_select %p102, %s103, %s104
    %p108 = pneg %p102
    %p109 = scmp.eq.s32.totalorder %s9, 1
    %p110 = por %p108, %p109
    %p111 = scmp.ne.s32.totalorder %s103, %s106
    %p112 = scmp.eq.s32.totalorder %s9, 0
    %p113 = por %p111, %p112
    %p114 = scmp.ne.s32.totalorder %s103, %s106
    %p115 = scmp.eq.s32.totalorder %s14, 1
    %p116 = por %p114, %p115
    %p117 = scmp.ne.s32.totalorder %s106, %s107
    %p118 = scmp.eq.s32.totalorder %s14, 0
    %p119 = por %p117, %p118
    %p120 = scmp.ne.s32.totalorder %s106, %s107
    %p121 = scmp.eq.s32.totalorder %s15, 1
    %p122 = por %p120, %p121
    %p124 = scmp.ne.s32.totalorder %s107, %s123
    %p125 = scmp.eq.s32.totalorder %s15, 0
    %p126 = por %p124, %p125
    %p127 = scmp.le.s32.totalorder 1, %s9
    %p128 = scmp.lt.s32.totalorder %s9, 3
    %p129 = pnand %p127, %p128
    %p130 = pneg %p129
    // Predicated region
    $region9: #{out_conv.1} parent=5 // pred_check
      _
    $region10: #{out_conv.1} parent=5 // pred_check_branch
      %132 = sbr.rel (%p129) target = $region12
    $region11: #{out_conv.1} parent=5 // pred_region
      %s133 = ssub.s32 %s9, 1
      // Predicated region
      $region13: #{out_conv.1} parent=11 // pred_check
        %p134 = pneg %p70
      $region14: #{out_conv.1} parent=11 // pred_check_branch
        %136 = sbr.rel (%p134) target = $region16
      $region15: #{out_conv.1} parent=11 // pred_region
        _
      $region16: #{out_conv.1} parent=11 // pred_fallthru
        _
      // Predicated region
      $region17: #{out_conv.1} parent=11 // pred_check
        %p137 = pneg %p91
      $region18: #{out_conv.1} parent=11 // pred_check_branch
        %139 = sbr.rel (%p137) target = $region20
      $region19: #{out_conv.1} parent=11 // pred_region
        _
      $region20: #{out_conv.1} parent=11 // pred_fallthru
        _
    $region12: #{out_conv.1} parent=5 // pred_fallthru
      _
    %p140 = scmp.lt.s32.totalorder %s9, 2
    // Predicated region
    $region21: #{out_conv.1} parent=5 // pred_check
      %p141 = pneg %p140
    $region22: #{out_conv.1} parent=5 // pred_check_branch
      %143 = sbr.rel (%p141) target = $region24
    $region23: #{out_conv.1} parent=5 // pred_region
      // Predicated region
      $region25: #{out_conv.1} parent=23 // pred_check
        %p144 = pneg %p43
      $region26: #{out_conv.1} parent=23 // pred_check_branch
        %146 = sbr.rel (%p144) target = $region28
      $region27: #{out_conv.1} parent=23 // pred_region
        %s147 = smul.u32 2, %s17
        %p148 = scmp.lt.s32.totalorder %s16, 1
        %s149 = scalar_select %p148, %s16, 1
        %p150 = scmp.lt.s32.totalorder %s147, 1
        %s151 = scalar_select %p150, %s147, 1
        %s152 = smul.addr %s149, 2
        %s153 = sadd.s32 %s151, %s152
        %s154 = smul.addr %s153, 4
        %s155 = scalar_lea.vmem %s0, %s154
        %s156 = smul.u32 2, %s17
      $region28: #{out_conv.1} parent=23 // pred_fallthru
        _
    $region24: #{out_conv.1} parent=5 // pred_fallthru
      _
    %p157 = scmp.le.s32.totalorder 1, %s9
    %p158 = scmp.lt.s32.totalorder %s9, 3
    %p159 = pnand %p157, %p158
    %p160 = pneg %p159
    // Predicated region
    $region29: #{out_conv.1} parent=5 // pred_check
      _
    $region30: #{out_conv.1} parent=5 // pred_check_branch
      %162 = sbr.rel (%p159) target = $region32
    $region31: #{out_conv.1} parent=5 // pred_region
      %s163 = ssub.s32 %s9, 1
      %s164 = smul.u32 2, %s19
      %p165 = scmp.lt.s32.totalorder %s18, 1
      %s166 = scalar_select %p165, %s18, 1
      %p167 = scmp.lt.s32.totalorder %s164, 1
      %s168 = scalar_select %p167, %s164, 1
      %s169 = smul.addr %s166, 2
      %s170 = sadd.s32 %s168, %s169
      %s171 = smul.addr %s170, 4
      %s172 = scalar_lea.vmem %s0, %s171
      %p173 = pneg %p49
      %p174 = pneg %p46
      %p175 = pneg %p70
      %p176 = pneg %p67
      %p177 = pneg %p91
      %p178 = pneg %p88
      %p179 = pneg %p119
      %p180 = pneg %p116
      %s181 = smul.u32 2, %s19
      %p182 = scmp.lt.s32.totalorder %s18, 1
      %s183 = scalar_select %p182, %s18, 1
      %p184 = scmp.lt.s32.totalorder %s181, 1
      %s185 = scalar_select %p184, %s181, 1
      %s186 = smul.addr %s183, 2
      %s187 = sadd.s32 %s185, %s186
      %s188 = smul.addr %s187, 4
      %s189 = scalar_lea.vmem %s3, %s188
      %s190 = smul.u32 2, %s19
      %p191 = scmp.lt.s32.totalorder %s18, 1
      %s192 = scalar_select %p191, %s18, 1
      %p193 = scmp.lt.s32.totalorder %s190, 1
      %s194 = scalar_select %p193, %s190, 1
      %s195 = smul.addr %s192, 2
      %s196 = sadd.s32 %s194, %s195
      %s197 = smul.addr %s196, 4
      %s198 = scalar_lea.vmem %s0, %s197
      %s199 = smul.u32 2, %s19
      %s200 = smul.u32 2, %s19
      %p201 = scmp.lt.s32.totalorder %s18, 1
      %s202 = scalar_select %p201, %s18, 1
      %p203 = scmp.lt.s32.totalorder %s200, 1
      %s204 = scalar_select %p203, %s200, 1
      %s205 = smul.addr %s202, 2
      %s206 = sadd.s32 %s204, %s205
      %s207 = smul.addr %s206, 4
      %s208 = scalar_lea.vmem %s3, %s207
      %s209 = smul.u32 2, %s19
      %v210 = vld [vmem:[%s198] sm:$0xff]
      %v211 = vld [vmem:[%s1] sm:$0x7]
      %v212 = vld [vmem:[%s2] sm:$0x7]
      %214 = vset.pattern.permute.xlu0 0
      %215 = vperm.xlu0 %214, %v211
      %v216 = vpop.permute.xlu0 %215
      %v219 = vlaneseq
      %v220 = vshrl.u32 %v219, 7
      %v221 = vsub.s32 0, %v220
      %v222 = vrot.slane %v210, %v221
      %v223 = vlaneseq
      %v224 = vshrl.u32 %v223, 7
      %v225 = vsub.s32 4, %v224
      %v226 = vrot.slane %v210, %v225
      %v229 = vlaneseq
      %v230 = vshrl.u32 %v229, 7
      %v231 = vsub.s32 0, %v230
      %v232 = vrot.slane %v222, %v231
      %v233 = vlaneseq
      %v234 = vshrl.u32 %v233, 7
      %v235 = vsub.s32 0, %v234
      %v236 = vrot.slane %v226, %v235
      %v237 = vmul.f32 %v216, %v232
      %v238 = vmul.f32 %v216, %v236
      %239 = vset.pattern.permute.xlu0 1
      %240 = vperm.xlu0 %239, %v211
      %v241 = vpop.permute.xlu0 %240
      %v243 = vlaneseq
      %v244 = vshrl.u32 %v243, 7
      %v245 = vsub.s32 1, %v244
      %v246 = vrot.slane %v210, %v245
      %v247 = vlaneseq
      %v248 = vshrl.u32 %v247, 7
      %v249 = vsub.s32 5, %v248
      %v250 = vrot.slane %v210, %v249
      %v253 = vlaneseq
      %v254 = vshrl.u32 %v253, 7
      %v255 = vsub.s32 1, %v254
      %v256 = vrot.slane %v246, %v255
      %v257 = vlaneseq
      %v258 = vshrl.u32 %v257, 7
      %v259 = vsub.s32 1, %v258
      %v260 = vrot.slane %v250, %v259
      %v261 = vmul.f32 %v241, %v256
      %v262 = vmul.f32 %v241, %v260
      %v263 = vadd.f32 %v237, %v261
      %v264 = vadd.f32 %v238, %v262
      %265 = vset.pattern.permute.xlu0 2
      %266 = vperm.xlu0 %265, %v211
      %v267 = vpop.permute.xlu0 %266
      %v269 = vlaneseq
      %v270 = vshrl.u32 %v269, 7
      %v271 = vsub.s32 2, %v270
      %v272 = vrot.slane %v210, %v271
      %v273 = vlaneseq
      %v274 = vshrl.u32 %v273, 7
      %v275 = vsub.s32 6, %v274
      %v276 = vrot.slane %v210, %v275
      %v279 = vlaneseq
      %v280 = vshrl.u32 %v279, 7
      %v281 = vsub.s32 2, %v280
      %v282 = vrot.slane %v272, %v281
      %v283 = vlaneseq
      %v284 = vshrl.u32 %v283, 7
      %v285 = vsub.s32 2, %v284
      %v286 = vrot.slane %v276, %v285
      %v287 = vmul.f32 %v267, %v282
      %v288 = vmul.f32 %v267, %v286
      %v289 = vadd.f32 %v263, %v287
      %v290 = vadd.f32 %v264, %v288
      %291 = vset.pattern.permute.xlu0 3
      %292 = vperm.xlu0 %291, %v211
      %v293 = vpop.permute.xlu0 %292
      %v295 = vlaneseq
      %v296 = vshrl.u32 %v295, 7
      %v297 = vsub.s32 3, %v296
      %v298 = vrot.slane %v210, %v297
      %v299 = vlaneseq
      %v300 = vshrl.u32 %v299, 7
      %v301 = vsub.s32 7, %v300
      %v302 = vrot.slane %v210, %v301
      %v305 = vlaneseq
      %v306 = vshrl.u32 %v305, 7
      %v307 = vsub.s32 3, %v306
      %v308 = vrot.slane %v298, %v307
      %v309 = vlaneseq
      %v310 = vshrl.u32 %v309, 7
      %v311 = vsub.s32 3, %v310
      %v312 = vrot.slane %v302, %v311
      %v313 = vmul.f32 %v293, %v308
      %v314 = vmul.f32 %v293, %v312
      %v315 = vadd.f32 %v289, %v313
      %v316 = vadd.f32 %v290, %v314
      %318 = vset.pattern.permute.xlu0 0
      %319 = vperm.xlu0 %318, %v212
      %v320 = vpop.permute.xlu0 %319
      %v322 = vadd.f32 %v315, %v320
      %v323 = vadd.f32 %v316, %v320
      %v326 = vcombine.low %v322, %v323
      %328 = vst [vmem:[%s208] sm:$0x77] %v326
      %s329 = smul.u32 2, %s19
      %p330 = scmp.lt.s32.totalorder %s18, 1
      %s331 = scalar_select %p330, %s18, 1
      %p332 = scmp.lt.s32.totalorder %s329, 1
      %s333 = scalar_select %p332, %s329, 1
      %s334 = smul.addr %s331, 2
      %s335 = sadd.s32 %s333, %s334
      %s336 = smul.addr %s335, 4
      %s337 = scalar_lea.vmem %s3, %s336
      // Predicated region
      $region33: #{out_conv.1} parent=31 // pred_check
        %p338 = pneg %p116
      $region34: #{out_conv.1} parent=31 // pred_check_branch
        %340 = sbr.rel (%p338) target = $region36
      $region35: #{out_conv.1} parent=31 // pred_region
        %s341 = smul.u32 2, %s19
      $region36: #{out_conv.1} parent=31 // pred_fallthru
        _
    $region32: #{out_conv.1} parent=5 // pred_fallthru
      _
    %p342 = scmp.le.s32.totalorder 2, %s9
    // Predicated region
    $region37: #{out_conv.1} parent=5 // pred_check
      %p343 = pneg %p342
    $region38: #{out_conv.1} parent=5 // pred_check_branch
      %345 = sbr.rel (%p343) target = $region40
    $region39: #{out_conv.1} parent=5 // pred_region
      %s346 = ssub.s32 %s9, 2
      // Predicated region
      $region41: #{out_conv.1} parent=39 // pred_check
        %p347 = pneg %p122
      $region42: #{out_conv.1} parent=39 // pred_check_branch
        %349 = sbr.rel (%p347) target = $region44
      $region43: #{out_conv.1} parent=39 // pred_region
        %s350 = smul.u32 2, %s21
        %p351 = scmp.lt.s32.totalorder %s20, 1
        %s352 = scalar_select %p351, %s20, 1
        %p353 = scmp.lt.s32.totalorder %s350, 1
        %s354 = scalar_select %p353, %s350, 1
        %s355 = smul.addr %s352, 2
        %s356 = sadd.s32 %s354, %s355
        %s357 = smul.addr %s356, 4
        %s358 = scalar_lea.vmem %s3, %s357
      $region44: #{out_conv.1} parent=39 // pred_fallthru
        _
    $region40: #{out_conv.1} parent=5 // pred_fallthru
      _
  $region6: #{out_conv.1} parent=0 // loop_footer
    %s13 = sadd.s32 1, %s9
  $region7: #{out_conv.1} parent=0 // loop_footer_branch
    %8 = sbr.rel target = $region3
  $region8: #{out_conv.1} parent=0 // loop_exit
    _

</llo_original>
